<compile_context>
chip_gen: v5e
topology: v5e:2x2
jax: 0.10.0
libtpu: 0.0.40
codegen_flags: <defaults>
</compile_context>

<pallas_src>
import jax
import jax.numpy as jnp
from jax.experimental import pallas as pl
from jax.experimental.pallas import tpu as pltpu

# ---- static configuration (small shapes consistent with the module) ----
BATCH = 2
NUM_CHANNELS = 4            # x has 4 channels; forward uses x[:, :3]
IMAGE_SIZE = 16             # S
NUM_CLASSES = 4             # class_predictor = Linear(in, NUM_CLASSES + 1); last col dropped
NUM_QUERIES = 8             # Q
HIDDEN = 32                 # decoder hidden size
DOWN = 4                    # stride of the stubbed pixel decoder
MASK_HW = IMAGE_SIZE // DOWN
P = MASK_HW * MASK_HW       # flattened mask spatial size (16)
OUT_P = IMAGE_SIZE * IMAGE_SIZE   # 256
ROWS = BATCH * NUM_CLASSES        # 8 output rows (b, class)


# --------------------------- Pallas kernel -----------------------------------
def _m2f_kernel(x_ref, mix_ref, r_ref, out_ref):
    f32 = jnp.float32
    # Block-diagonal per-batch channel mix: one 8-row matmul replaces the former
    # per-batch loop + sublane-crossing concatenate.
    t = jnp.dot(mix_ref[...], x_ref[...], preferred_element_type=f32)      # (B*C, S*S)
    # Fused (4x4 avg-pool ∘ bilinear upsample) operator: single lane-dense K=256 matmul,
    # one unmasked (8, 256) store.
    out_ref[...] = jnp.dot(t, r_ref[...], preferred_element_type=f32)      # (B*C, S*S)


def _m2f_fused_pallas(x_flat, mix, r):
    vmem = lambda: pl.BlockSpec(memory_space=pltpu.MemorySpace.VMEM)
    return pl.pallas_call(
        _m2f_kernel,
        out_shape=jax.ShapeDtypeStruct((ROWS, OUT_P), jnp.float32),
        in_specs=[vmem(), vmem(), vmem()],   # 3 whole-array VMEM refs (was 9 DMAs)
        out_specs=vmem(),
    )(x_flat, mix, r)


# ------------------------------- glue -----------------------------------------
def _interp_matrix(out_size, in_size):
    """Row-interpolation matrix matching F.interpolate(mode='bilinear', align_corners=False)."""
    scale = in_size / out_size
    dst = jnp.arange(out_size, dtype=jnp.float32)
    src = jnp.maximum((dst + 0.5) * scale - 0.5, 0.0)
    i0 = jnp.minimum(jnp.floor(src).astype(jnp.int32), in_size - 1)
    i1 = jnp.minimum(i0 + 1, in_size - 1)
    frac = src - i0.astype(jnp.float32)
    w = jnp.zeros((out_size, in_size), jnp.float32)
    w = w.at[jnp.arange(out_size), i0].add(1.0 - frac)
    w = w.at[jnp.arange(out_size), i1].add(frac)
    return w


def _pool_matrix(in_size, factor):
    """One-axis average-pool matrix of shape (in_size // factor, in_size)."""
    out_size = in_size // factor
    rows = jnp.repeat(jnp.arange(out_size), factor)
    cols = jnp.arange(in_size)
    m = jnp.zeros((out_size, in_size), jnp.float32)
    return m.at[rows, cols].set(1.0 / factor)


def init_params(key):
    k = jax.random.split(key, 6)
    s = 0.1
    return {
        "queries": s * jax.random.normal(k[0], (NUM_QUERIES, HIDDEN), jnp.float32),
        "w_class": s * jax.random.normal(k[1], (HIDDEN, NUM_CLASSES + 1), jnp.float32),
        "b_class": s * jax.random.normal(k[2], (NUM_CLASSES + 1,), jnp.float32),
        "w_mask":  s * jax.random.normal(k[3], (HIDDEN, HIDDEN), jnp.float32),
        "b_mask":  s * jax.random.normal(k[4], (HIDDEN,), jnp.float32),
        "w_pix":   s * jax.random.normal(k[5], (HIDDEN, 3), jnp.float32),
    }


def prepare_kernel_params(params):
    """One-time, parameter-only prep hoisted out of the per-forward kernel.

    Computes: class logits (dropped "no object" column never formed), exact softmax,
    mask embeddings, A = probs^T @ m_embed @ w_pix (C, 3), zero-pads the dropped 4th
    input channel (implements x[:, :3]) and folds it into a block-diagonal
    (B*C, B*num_channels) channel-mixing matrix consumed by the kernel.
    """
    q = params["queries"]                                                   # (Q, HIDDEN)
    cls = q @ params["w_class"][:, :NUM_CLASSES] + params["b_class"][:NUM_CLASSES]
    probs = jax.nn.softmax(cls, axis=-1)                                    # exact softmax
    m_embed = q @ params["w_mask"] + params["b_mask"]                       # (Q, HIDDEN)
    a = probs.T @ m_embed                                                   # (C, HIDDEN)
    a3 = a @ params["w_pix"]                                                # (C, 3)
    a4 = jnp.pad(a3, ((0, 0), (0, NUM_CHANNELS - 3)))                       # zero 4th column
    mix = jnp.kron(jnp.eye(BATCH, dtype=jnp.float32), a4)                   # (B*C, B*num_channels)
    return mix


def prepare_operators():
    """Host-side constant operators (computed once, outside the per-forward path)."""
    wy = _interp_matrix(IMAGE_SIZE, MASK_HW)          # (S, h) bilinear rows
    wx = _interp_matrix(IMAGE_SIZE, MASK_HW)          # (S, w) bilinear cols
    py = _pool_matrix(IMAGE_SIZE, DOWN)               # (h, S) avg-pool rows
    px = _pool_matrix(IMAGE_SIZE, DOWN)               # (w, S) avg-pool cols
    pool_m = jnp.kron(py, px).T                       # (S*S, P)  flattened 4x4 avg pool
    up_m = jnp.kron(wy, wx).T                         # (P, S*S)  flattened bilinear upsample
    r = jnp.dot(pool_m, up_m)                         # fused pool∘upsample (S*S, S*S) = 256 KiB
    return wy, wx, r


@jax.jit
def mask2former_wrapper_forward(x, mix, r):
    # Only non-Pallas per-forward work: two free reshapes (layout plumbing).
    x_flat = x.reshape(BATCH * NUM_CHANNELS, OUT_P)
    out_flat = _m2f_fused_pallas(x_flat, mix, r)
    return out_flat.reshape(BATCH, NUM_CLASSES, IMAGE_SIZE, IMAGE_SIZE)


def reference_forward(x, params, wy, wx):
    """Pure-JAX reference with the same semantics (sanity check only)."""
    x3 = x[:, :3]
    x_ds = x3.reshape(BATCH, 3, MASK_HW, DOWN, MASK_HW, DOWN).mean(axis=(3, 5))
    q = jnp.broadcast_to(params["queries"][None], (BATCH, NUM_QUERIES, HIDDEN))
    cls = jnp.einsum("bqd,dc->bqc", q, params["w_class"]) + params["b_class"]
    probs = jax.nn.softmax(cls[:, :, :NUM_CLASSES], axis=-1)
    m_embed = jnp.einsum("bqd,de->bqe", q, params["w_mask"]) + params["b_mask"]
    pix = jnp.einsum("dc,bchw->bdhw", params["w_pix"], x_ds)
    mask_logits = jnp.einsum("bqd,bdhw->bqhw", m_embed, pix)
    seg = jnp.einsum("bqc,bqhw->bchw", probs, mask_logits)
    return jnp.einsum("bchw,Hh,Ww->bcHW", seg, wy, wx)


if __name__ == "__main__":
    key = jax.random.PRNGKey(0)
    kx, kp = jax.random.split(key)
    x = jax.random.normal(kx, (BATCH, NUM_CHANNELS, IMAGE_SIZE, IMAGE_SIZE), jnp.float32)
    params = init_params(kp)

    wy, wx, r = prepare_operators()
    mix = prepare_kernel_params(params)

    out = mask2former_wrapper_forward(x, mix, r)
    out = jax.block_until_ready(out)

    ref = reference_forward(x, params, wy, wx)
    assert out.shape == (BATCH, NUM_CLASSES, IMAGE_SIZE, IMAGE_SIZE)
    assert jnp.allclose(out, ref, rtol=2e-3, atol=2e-3), "kernel mismatch vs reference"

    print("KERNEL_OK")
</pallas_src>

<mosaic_0001>
module attributes {stable_mosaic.version = 11 : i64} {
  func.func @_m2f_kernel(%arg0: memref<8x256xf32, #tpu.memory_space<vmem>>, %arg1: memref<8x8xf32, #tpu.memory_space<vmem>>, %arg2: memref<256x256xf32, #tpu.memory_space<vmem>>, %arg3: memref<8x256xf32, #tpu.memory_space<vmem>>) attributes {dimension_semantics = [], scalar_prefetch = 0 : i64, scratch_operands = 0 : i64, tpu.core_type = #tpu.core_type<tc>} {
    %c0 = arith.constant 0 : index
    %c0_0 = arith.constant 0 : index
    %0 = vector.load %arg1[%c0, %c0_0] : memref<8x8xf32, #tpu.memory_space<vmem>>, vector<8x8xf32>
    %c0_1 = arith.constant 0 : index
    %c0_2 = arith.constant 0 : index
    %1 = vector.load %arg0[%c0_1, %c0_2] : memref<8x256xf32, #tpu.memory_space<vmem>>, vector<8x256xf32>
    %cst = arith.constant dense<0.000000e+00> : vector<8x256xf32>
    %2 = tpu.matmul %0, %1, %cst {dimension_numbers = #tpu.dot_dimension_numbers<[1], [0], [0], [1], [0, 0, 1, 1], [], []>} : vector<8x8xf32>, vector<8x256xf32>, vector<8x256xf32> -> vector<8x256xf32>
    %c0_3 = arith.constant 0 : index
    %c0_4 = arith.constant 0 : index
    %3 = vector.load %arg2[%c0_3, %c0_4] : memref<256x256xf32, #tpu.memory_space<vmem>>, vector<256x256xf32>
    %cst_5 = arith.constant dense<0.000000e+00> : vector<8x256xf32>
    %4 = tpu.matmul %2, %3, %cst_5 {dimension_numbers = #tpu.dot_dimension_numbers<[1], [0], [0], [1], [0, 0, 1, 1], [], []>} : vector<8x256xf32>, vector<256x256xf32>, vector<8x256xf32> -> vector<8x256xf32>
    %c0_6 = arith.constant 0 : index
    %c0_7 = arith.constant 0 : index
    %5 = vector.load %arg3[%c0_6, %c0_7] : memref<8x256xf32, #tpu.memory_space<vmem>>, vector<8x256xf32>
    tpu.vector_store %arg3[%c0_6, %c0_7], %4 {strides = array<i32>} : memref<8x256xf32, #tpu.memory_space<vmem>>, vector<8x256xf32>,
    return
  }
}

</mosaic_0001>

<llo_original>
// kernel: mask2former_wrapper_forward.1
$region0: #{mask2former_wrapper_forward.1}
  #allocation0 [shape = 'u32[]', space=smem, size = 0x4, offset = 0x4, fixed_abs, tag = 'smem constant byte address 0x4 - core index']
  #allocation1 [shape = 'u32[72,128]{1,0:T(1,128)}', space=vmem, size = 0x9000, scoped, tag = 'internal scratch']
  %s0 = inlined_call_operand.vmem [shape: f32[8,256], index: 0, kind: input, shape index: {}]
  %s1 = inlined_call_operand.vmem [shape: f32[8,8], index: 1, kind: input, shape index: {}]
  %s2 = inlined_call_operand.hbm [shape: f32[256,256], index: 2, kind: input, shape index: {}]
  %s3 = inlined_call_operand.vmem [shape: f32[8,256], index: 3, kind: output, shape index: {}]
  %s4 = sld [smem:[#allocation0]]
  $region26: #{mask2former_wrapper_forward.1} parent=0
    _
  %s6 = ssub.s32 1, %s4
  %s7 = scalar_select 0, %s6, %s4
  $region1: #{mask2former_wrapper_forward.1} parent=0
    #allocation2 [shape = 'u8[262144]{0}', space=vmem, size = 0x40000, scoped, tag = 'input window, operand 2, single buffered']
    #allocation3 [shape = 's32[1]{0}', space=sflag, size = 0x4, scoped, tag = 'scoped memory for mask2former_wrapper_forward.1']
    %8 = vsyncpa [#allocation3], 0
    // Predicated region
    $region2: #{mask2former_wrapper_forward.1} parent=1 // pred_check
      _
    $region3: #{mask2former_wrapper_forward.1} parent=1 // pred_check_branch
      %10 = sbr.rel (0) target = $region5
    $region4: #{mask2former_wrapper_forward.1} parent=1 // pred_region
      _
    $region5: #{mask2former_wrapper_forward.1} parent=1 // pred_fallthru
      _
    // Predicated region
    $region6: #{mask2former_wrapper_forward.1} parent=1 // pred_check
      _
    $region7: #{mask2former_wrapper_forward.1} parent=1 // pred_check_branch
      %12 = sbr.rel (0) target = $region9
    $region8: #{mask2former_wrapper_forward.1} parent=1 // pred_region
      _
    $region9: #{mask2former_wrapper_forward.1} parent=1 // pred_fallthru
      _
    // Predicated region
    $region10: #{mask2former_wrapper_forward.1} parent=1 // pred_check
      _
    $region11: #{mask2former_wrapper_forward.1} parent=1 // pred_check_branch
      %14 = sbr.rel (0) target = $region13
    $region12: #{mask2former_wrapper_forward.1} parent=1 // pred_region
      %16 = vsyncadd [#allocation3], 0
      %s17 = sshll.u32 %s2, 4
      %s18 = int_to_ptr.hbm [resolvable:$true] %s17
      %s19 = sshll.u32 [#allocation2], 4
      %s20 = int_to_ptr.vmem [resolvable:$true] %s19
      %25 = dma.hbm_to_vmem [thread:$0]  %s18, 8192, %s20, [#allocation3], 256, 256, 16
    $region13: #{mask2former_wrapper_forward.1} parent=1 // pred_fallthru
      _
    // Predicated region
    $region14: #{mask2former_wrapper_forward.1} parent=1 // pred_check
      _
    $region15: #{mask2former_wrapper_forward.1} parent=1 // pred_check_branch
      %27 = sbr.rel (0) target = $region17
    $region16: #{mask2former_wrapper_forward.1} parent=1 // pred_region
      %29 = dma.done [#allocation3], 8192
    $region17: #{mask2former_wrapper_forward.1} parent=1 // pred_fallthru
      _
    %v30 = vld [vmem:[%s1] sm:$0xff]
    %v31 = vld [vmem:[%s0] sm:$0xff]
    %v32 = vld [vmem:[%s0 + $0x8] sm:$0xff]
    %vm33 = vcmask 64512
    %v35 = vsel %vm33, %v30, 0
    %37 = vmatpush.msra.mxu0 0.0
    %38 = vmatpush.msra.mxu0 0.0
    %39 = vmatpush.msra.mxu0 0.0
    %40 = vmatpush.msra.mxu0 0.0
    %41 = vmatpush.msra.mxu0 0.0
    %42 = vmatpush.msra.mxu0 0.0
    %43 = vmatpush.msra.mxu0 0.0
    %44 = vmatpush.msra.mxu0 0.0
    %45 = vmatpush.msra.mxu0 0.0
    %46 = vmatpush.msra.mxu0 0.0
    %47 = vmatpush.msra.mxu0 0.0
    %48 = vmatpush.msra.mxu0 0.0
    %49 = vmatpush.msra.mxu0 0.0
    %50 = vmatpush.msra.mxu0 0.0
    %51 = vmatpush.msra.mxu0 0.0
    %52 = vmatpush.msra.mxu0 %v31
    %53 = vmatmul.f32.gmra.mxu0 %v35
    %v54 = vpop.f32.mrf.mxu0
    %v55 = vadd.f32 0.0, %v54
    %56 = vdwg.mxu0
    %57 = vmatpush.msra.mxu0 0.0
    %58 = vmatpush.msra.mxu0 0.0
    %59 = vmatpush.msra.mxu0 0.0
    %60 = vmatpush.msra.mxu0 0.0
    %61 = vmatpush.msra.mxu0 0.0
    %62 = vmatpush.msra.mxu0 0.0
    %63 = vmatpush.msra.mxu0 0.0
    %64 = vmatpush.msra.mxu0 0.0
    %65 = vmatpush.msra.mxu0 0.0
    %66 = vmatpush.msra.mxu0 0.0
    %67 = vmatpush.msra.mxu0 0.0
    %68 = vmatpush.msra.mxu0 0.0
    %69 = vmatpush.msra.mxu0 0.0
    %70 = vmatpush.msra.mxu0 0.0
    %71 = vmatpush.msra.mxu0 0.0
    %72 = vmatpush.msra.mxu0 %v32
    %73 = vmatmul.f32.gmra.mxu0 %v35
    %v74 = vpop.f32.mrf.mxu0
    %v75 = vadd.f32 0.0, %v74
    %76 = vdwg.mxu0
    %v77 = vld [vmem:[#allocation2] sm:$0xff]
    %v78 = vld [vmem:[#allocation2 + $0x8] sm:$0xff]
    %v79 = vld [vmem:[#allocation2 + $0x10] sm:$0xff]
    %v80 = vld [vmem:[#allocation2 + $0x18] sm:$0xff]
    %v81 = vld [vmem:[#allocation2 + $0x20] sm:$0xff]
    %v82 = vld [vmem:[#allocation2 + $0x28] sm:$0xff]
    %v83 = vld [vmem:[#allocation2 + $0x30] sm:$0xff]
    %v84 = vld [vmem:[#allocation2 + $0x38] sm:$0xff]
    %v85 = vld [vmem:[#allocation2 + $0x40] sm:$0xff]
    %v86 = vld [vmem:[#allocation2 + $0x48] sm:$0xff]
    %v87 = vld [vmem:[#allocation2 + $0x50] sm:$0xff]
    %v88 = vld [vmem:[#allocation2 + $0x58] sm:$0xff]
    %v89 = vld [vmem:[#allocation2 + $0x60] sm:$0xff]
    %v90 = vld [vmem:[#allocation2 + $0x68] sm:$0xff]
    %v91 = vld [vmem:[#allocation2 + $0x70] sm:$0xff]
    %v92 = vld [vmem:[#allocation2 + $0x78] sm:$0xff]
    %v93 = vld [vmem:[#allocation2 + $0x80] sm:$0xff]
    %v94 = vld [vmem:[#allocation2 + $0x88] sm:$0xff]
    %v95 = vld [vmem:[#allocation2 + $0x90] sm:$0xff]
    %v96 = vld [vmem:[#allocation2 + $0x98] sm:$0xff]
    %v97 = vld [vmem:[#allocation2 + $0xa0] sm:$0xff]
    %v98 = vld [vmem:[#allocation2 + $0xa8] sm:$0xff]
    %v99 = vld [vmem:[#allocation2 + $0xb0] sm:$0xff]
    %v100 = vld [vmem:[#allocation2 + $0xb8] sm:$0xff]
    %v101 = vld [vmem:[#allocation2 + $0xc0] sm:$0xff]
    %v102 = vld [vmem:[#allocation2 + $0xc8] sm:$0xff]
    %v103 = vld [vmem:[#allocation2 + $0xd0] sm:$0xff]
    %v104 = vld [vmem:[#allocation2 + $0xd8] sm:$0xff]
    %v105 = vld [vmem:[#allocation2 + $0xe0] sm:$0xff]
    %v106 = vld [vmem:[#allocation2 + $0xe8] sm:$0xff]
    %v107 = vld [vmem:[#allocation2 + $0xf0] sm:$0xff]
    %v108 = vld [vmem:[#allocation2 + $0xf8] sm:$0xff]
    %v109 = vld [vmem:[#allocation2 + $0x100] sm:$0xff]
    %v110 = vld [vmem:[#allocation2 + $0x108] sm:$0xff]
    %v111 = vld [vmem:[#allocation2 + $0x110] sm:$0xff]
    %v112 = vld [vmem:[#allocation2 + $0x118] sm:$0xff]
    %v113 = vld [vmem:[#allocation2 + $0x120] sm:$0xff]
    %v114 = vld [vmem:[#allocation2 + $0x128] sm:$0xff]
    %v115 = vld [vmem:[#allocation2 + $0x130] sm:$0xff]
    %v116 = vld [vmem:[#allocation2 + $0x138] sm:$0xff]
    %v117 = vld [vmem:[#allocation2 + $0x140] sm:$0xff]
    %v118 = vld [vmem:[#allocation2 + $0x148] sm:$0xff]
    %v119 = vld [vmem:[#allocation2 + $0x150] sm:$0xff]
    %v120 = vld [vmem:[#allocation2 + $0x158] sm:$0xff]
    %v121 = vld [vmem:[#allocation2 + $0x160] sm:$0xff]
    %v122 = vld [vmem:[#allocation2 + $0x168] sm:$0xff]
    %v123 = vld [vmem:[#allocation2 + $0x170] sm:$0xff]
    %v124 = vld [vmem:[#allocation2 + $0x178] sm:$0xff]
    %v125 = vld [vmem:[#allocation2 + $0x180] sm:$0xff]
    %v126 = vld [vmem:[#allocation2 + $0x188] sm:$0xff]
    %v127 = vld [vmem:[#allocation2 + $0x190] sm:$0xff]
    %v128 = vld [vmem:[#allocation2 + $0x198] sm:$0xff]
    %v129 = vld [vmem:[#allocation2 + $0x1a0] sm:$0xff]
    %v130 = vld [vmem:[#allocation2 + $0x1a8] sm:$0xff]
    %v131 = vld [vmem:[#allocation2 + $0x1b0] sm:$0xff]
    %v132 = vld [vmem:[#allocation2 + $0x1b8] sm:$0xff]
    %v133 = vld [vmem:[#allocation2 + $0x1c0] sm:$0xff]
    %v134 = vld [vmem:[#allocation2 + $0x1c8] sm:$0xff]
    %v135 = vld [vmem:[#allocation2 + $0x1d0] sm:$0xff]
    %v136 = vld [vmem:[#allocation2 + $0x1d8] sm:$0xff]
    %v137 = vld [vmem:[#allocation2 + $0x1e0] sm:$0xff]
    %v138 = vld [vmem:[#allocation2 + $0x1e8] sm:$0xff]
    %v139 = vld [vmem:[#allocation2 + $0x1f0] sm:$0xff]
    %v140 = vld [vmem:[#allocation2 + $0x1f8] sm:$0xff]
    %141 = vmatpush.msra.mxu0 %v107
    %142 = vmatpush.msra.mxu0 %v105
    %143 = vmatpush.msra.mxu0 %v103
    %144 = vmatpush.msra.mxu0 %v101
    %145 = vmatpush.msra.mxu0 %v99
    %146 = vmatpush.msra.mxu0 %v97
    %147 = vmatpush.msra.mxu0 %v95
    %148 = vmatpush.msra.mxu0 %v93
    %149 = vmatpush.msra.mxu0 %v91
    %150 = vmatpush.msra.mxu0 %v89
    %151 = vmatpush.msra.mxu0 %v87
    %152 = vmatpush.msra.mxu0 %v85
    %153 = vmatpush.msra.mxu0 %v83
    %154 = vmatpush.msra.mxu0 %v81
    %155 = vmatpush.msra.mxu0 %v79
    %156 = vmatpush.msra.mxu0 %v77
    %157 = vmatmul.f32.gmra.mxu0 %v55
    %v158 = vpop.f32.mrf.mxu0
    %v159 = vadd.f32 0.0, %v158
    %160 = vdwg.mxu0
    %161 = vmatpush.msra.mxu0 %v139
    %162 = vmatpush.msra.mxu0 %v137
    %163 = vmatpush.msra.mxu0 %v135
    %164 = vmatpush.msra.mxu0 %v133
    %165 = vmatpush.msra.mxu0 %v131
    %166 = vmatpush.msra.mxu0 %v129
    %167 = vmatpush.msra.mxu0 %v127
    %168 = vmatpush.msra.mxu0 %v125
    %169 = vmatpush.msra.mxu0 %v123
    %170 = vmatpush.msra.mxu0 %v121
    %171 = vmatpush.msra.mxu0 %v119
    %172 = vmatpush.msra.mxu0 %v117
    %173 = vmatpush.msra.mxu0 %v115
    %174 = vmatpush.msra.mxu0 %v113
    %175 = vmatpush.msra.mxu0 %v111
    %176 = vmatpush.msra.mxu0 %v109
    %177 = vmatmul.f32.gmra.mxu0 %v75
    %v178 = vpop.f32.mrf.mxu0
    %v179 = vadd.f32 %v159, %v178
    %180 = vdwg.mxu0
    %181 = vmatpush.msra.mxu0 %v108
    %182 = vmatpush.msra.mxu0 %v106
    %183 = vmatpush.msra.mxu0 %v104
    %184 = vmatpush.msra.mxu0 %v102
    %185 = vmatpush.msra.mxu0 %v100
    %186 = vmatpush.msra.mxu0 %v98
    %187 = vmatpush.msra.mxu0 %v96
    %188 = vmatpush.msra.mxu0 %v94
    %189 = vmatpush.msra.mxu0 %v92
    %190 = vmatpush.msra.mxu0 %v90
    %191 = vmatpush.msra.mxu0 %v88
    %192 = vmatpush.msra.mxu0 %v86
    %193 = vmatpush.msra.mxu0 %v84
    %194 = vmatpush.msra.mxu0 %v82
    %195 = vmatpush.msra.mxu0 %v80
    %196 = vmatpush.msra.mxu0 %v78
    %197 = vmatmul.f32.gmra.mxu0 %v55
    %v198 = vpop.f32.mrf.mxu0
    %v199 = vadd.f32 0.0, %v198
    %200 = vdwg.mxu0
    %201 = vmatpush.msra.mxu0 %v140
    %202 = vmatpush.msra.mxu0 %v138
    %203 = vmatpush.msra.mxu0 %v136
    %204 = vmatpush.msra.mxu0 %v134
    %205 = vmatpush.msra.mxu0 %v132
    %206 = vmatpush.msra.mxu0 %v130
    %207 = vmatpush.msra.mxu0 %v128
    %208 = vmatpush.msra.mxu0 %v126
    %209 = vmatpush.msra.mxu0 %v124
    %210 = vmatpush.msra.mxu0 %v122
    %211 = vmatpush.msra.mxu0 %v120
    %212 = vmatpush.msra.mxu0 %v118
    %213 = vmatpush.msra.mxu0 %v116
    %214 = vmatpush.msra.mxu0 %v114
    %215 = vmatpush.msra.mxu0 %v112
    %216 = vmatpush.msra.mxu0 %v110
    %217 = vmatmul.f32.gmra.mxu0 %v75
    %v218 = vpop.f32.mrf.mxu0
    %v219 = vadd.f32 %v199, %v218
    %220 = vdwg.mxu0
    %221 = vst [vmem:[%s3] sm:$0xff] %v179
    %222 = vst [vmem:[%s3 + $0x8] sm:$0xff] %v219
    // Predicated region
    $region18: #{mask2former_wrapper_forward.1} parent=1 // pred_check
      _
    $region19: #{mask2former_wrapper_forward.1} parent=1 // pred_check_branch
      %224 = sbr.rel (0) target = $region21
    $region20: #{mask2former_wrapper_forward.1} parent=1 // pred_region
      _
    $region21: #{mask2former_wrapper_forward.1} parent=1 // pred_fallthru
      _
    // Predicated region
    $region22: #{mask2former_wrapper_forward.1} parent=1 // pred_check
      _
    $region23: #{mask2former_wrapper_forward.1} parent=1 // pred_check_branch
      %226 = sbr.rel (0) target = $region25
    $region24: #{mask2former_wrapper_forward.1} parent=1 // pred_region
      _
    $region25: #{mask2former_wrapper_forward.1} parent=1 // pred_fallthru
      _
    %227 = vsyncpa [#allocation3], 1

</llo_original>
